<compile_context>
chip_gen: v7x
topology: tpu7x:2x2x1
jax: 0.10.0
libtpu: 0.0.40
codegen_flags: <defaults>
</compile_context>

<pallas_src>
import math

import jax
import jax.numpy as jnp
from jax import lax
from jax.experimental import pallas as pl
from jax.experimental.pallas import tpu as pltpu


def skip_linear_kernel(x_ref, w_ref, b_ref, o_ref):
    """o = x + x @ W^T + b.

    W is in PyTorch (out, in) layout; the matmul contracts axis 1 of both
    operands (MXU, bf16 inputs, f32 accumulation). Residual + bias in f32.
    """
    x = x_ref[...]                                       # (bm, H), f32
    y = lax.dot_general(
        x.astype(w_ref.dtype), w_ref[...],               # contract H_in of both
        dimension_numbers=(((1,), (1,)), ((), ())),
        preferred_element_type=jnp.float32)              # f32 accumulate on MXU
    o_ref[...] = (x.astype(jnp.float32) + y + b_ref[...]).astype(o_ref.dtype)


def _round_up(x, m):
    return ((x + m - 1) // m) * m


def _auto_block_b(B, H, *, x_itemsize, w_itemsize, vmem_budget=44 << 20):
    """Largest batch tile whose double-buffered x/out tiles fit in VMEM next to
    the single-buffered weight+bias; capped at 512 and MXU/sublane aligned."""
    resident = H * H * w_itemsize + H * 4                # W + bias (1 buffer)
    per_row = 2 * 2 * H * x_itemsize                     # x + out, double-buffered
    fit = max((vmem_budget - resident) // per_row, 8)
    bm = int(min(512, fit))
    if bm >= 256:
        bm -= bm % 256                                   # match 2x256^2 MXU (v6e/v7x)
    else:
        bm -= bm % 8                                     # sublane multiple
    if B > 8:                                            # keep >=2 grid steps (v7x: 2 TCs)
        bm = min(bm, _round_up(pl.cdiv(B, 2), 8))
    return max(8, min(bm, _round_up(B, 8)))


def skip_connection_linear(x, w, b, *, block_b=None, matmul_dtype=jnp.bfloat16):
    """Fused SkipConnection(Linear): out = x + x @ w.T + b.

    x: (B, H) f32;  w: (H, H) PyTorch-layout weight (out, in);  b: (H,).
    """
    B, H = x.shape
    assert w.shape == (H, H) and b.shape == (H,)

    # Keep the (out, in) layout -- no transpose. Cast W to bf16 so its DMA and
    # VMEM footprint halve and the MXU runs its fast bf16 path.
    w_mm = w if w.dtype == matmul_dtype else w.astype(matmul_dtype)
    b2 = b.reshape(1, H).astype(jnp.float32)

    if block_b is None:
        block_b = _auto_block_b(B, H, x_itemsize=x.dtype.itemsize,
                                w_itemsize=w_mm.dtype.itemsize)
    grid = (pl.cdiv(B, block_b),)

    # VMEM actually needed: W + bias (1 buffer), x/out tiles (2 buffers each),
    # plus in-kernel temporaries; generous headroom, capped safely for v7x.
    tile_bytes = block_b * H * x.dtype.itemsize
    needed = (H * H * w_mm.dtype.itemsize + H * 4
              + 2 * 2 * tile_bytes + 2 * tile_bytes)
    vmem_limit = int(min(needed + (4 << 20), 56 << 20))

    cost = pl.CostEstimate(
        flops=2 * B * H * H,
        transcendentals=0,
        bytes_accessed=(2 * B * H * x.dtype.itemsize          # x in + out
                        + H * H * w_mm.dtype.itemsize + H * 4))  # W + bias

    def build(invariant_kwargs):
        return pl.pallas_call(
            skip_linear_kernel,
            out_shape=jax.ShapeDtypeStruct((B, H), x.dtype),
            grid_spec=pltpu.PrefetchScalarGridSpec(
                num_scalar_prefetch=0,
                grid=grid,
                in_specs=[
                    pl.BlockSpec((block_b, H), lambda i: (i, 0)),              # x tile
                    pl.BlockSpec((H, H), lambda i: (0, 0), **invariant_kwargs),  # W
                    pl.BlockSpec((1, H), lambda i: (0, 0), **invariant_kwargs),  # bias
                ],
                out_specs=pl.BlockSpec((block_b, H), lambda i: (i, 0)),
            ),
            compiler_params=pltpu.CompilerParams(
                dimension_semantics=("parallel",),
                vmem_limit_bytes=vmem_limit),
            cost_estimate=cost,
        )

    try:
        # Invariant operands (constant index_map) only need a single VMEM buffer.
        return build(dict(pipeline_mode=pl.Buffered(1)))(x, w_mm, b2)
    except Exception:
        # Fallback: default double-buffering (same results, slightly more VMEM).
        return build({})(x, w_mm, b2)


def init_linear_params(key, hidden):
    """Mirror torch.nn.Linear defaults: U(-1/sqrt(fan_in), 1/sqrt(fan_in))."""
    kw, kb = jax.random.split(key)
    bound = 1.0 / math.sqrt(hidden)
    w = jax.random.uniform(kw, (hidden, hidden), jnp.float32, -bound, bound)
    b = jax.random.uniform(kb, (hidden,), jnp.float32, -bound, bound)
    return w, b


def _reference_mixed(x, w, b, matmul_dtype=jnp.bfloat16):
    """Pure-JAX reference with the same bf16-matmul / f32-accumulate recipe."""
    y = jnp.dot(x.astype(matmul_dtype), w.astype(matmul_dtype).T,
                preferred_element_type=jnp.float32)
    return x + y + b


if __name__ == "__main__":
    key = jax.random.PRNGKey(0)
    kx, kp = jax.random.split(key)

    hidden = 128
    w, b = init_linear_params(kp, hidden)

    # Case 1: auto batch tile -> >=2 grid steps, exercises the pipeline.
    x1 = jax.random.normal(kx, (32, hidden), jnp.float32)
    out1 = jax.block_until_ready(skip_connection_linear(x1, w, b))

    # Case 2: small explicit tile with a ragged last block (masked writeback).
    x2 = x1[:20]
    out2 = jax.block_until_ready(skip_connection_linear(x2, w, b, block_b=8))

    for x, out in ((x1, out1), (x2, out2)):
        ref_mixed = _reference_mixed(x, w, b)   # same precision recipe
        ref_f32 = x + (x @ w.T + b)             # full-f32 semantic reference
        assert out.shape == ref_f32.shape and out.dtype == ref_f32.dtype
        assert jnp.allclose(out, ref_mixed, atol=1e-4, rtol=1e-4), "mismatch vs mixed ref"
        assert jnp.allclose(out, ref_f32, atol=5e-2, rtol=5e-2), "mismatch vs f32 ref"

    print("KERNEL_OK")
</pallas_src>

<mosaic_0001>
module attributes {stable_mosaic.version = 11 : i64} {
  func.func @skip_linear_kernel(%arg0: i32, %arg1: memref<16x128xf32, #tpu.memory_space<vmem>>, %arg2: memref<128x128xbf16, #tpu.memory_space<vmem>>, %arg3: memref<1x128xf32, #tpu.memory_space<vmem>>, %arg4: memref<16x128xf32, #tpu.memory_space<vmem>>) attributes {dimension_semantics = [#tpu.dimension_semantics<parallel>], iteration_bounds = array<i64: 2>, scalar_prefetch = 0 : i64, scratch_operands = 0 : i64, tpu.core_type = #tpu.core_type<tc>, window_params = [{transform_indices = @transform_0, window_bounds = array<i64: 16, 128>}, {pipeline_mode = #tpu.pipeline_mode<synchronous>, transform_indices = @transform_1, window_bounds = array<i64: 128, 128>}, {pipeline_mode = #tpu.pipeline_mode<synchronous>, transform_indices = @transform_2, window_bounds = array<i64: 1, 128>}, {transform_indices = @transform_3, window_bounds = array<i64: 16, 128>}]} {
    %c0 = arith.constant 0 : index
    %c0_0 = arith.constant 0 : index
    %0 = vector.load %arg1[%c0, %c0_0] : memref<16x128xf32, #tpu.memory_space<vmem>>, vector<16x128xf32>
    %1 = arith.truncf %0 : vector<16x128xf32> to vector<16x128xbf16>
    %c0_1 = arith.constant 0 : index
    %c0_2 = arith.constant 0 : index
    %2 = vector.load %arg2[%c0_1, %c0_2] : memref<128x128xbf16, #tpu.memory_space<vmem>>, vector<128x128xbf16>
    %cst = arith.constant dense<0.000000e+00> : vector<16x128xf32>
    %3 = tpu.matmul %1, %2, %cst {dimension_numbers = #tpu.dot_dimension_numbers<[1], [1], [0], [0], [0, 0, 1, 0], [], []>} : vector<16x128xbf16>, vector<128x128xbf16>, vector<16x128xf32> -> vector<16x128xf32>
    %4 = arith.addf %0, %3 : vector<16x128xf32>
    %c0_3 = arith.constant 0 : index
    %c0_4 = arith.constant 0 : index
    %5 = vector.load %arg3[%c0_3, %c0_4] : memref<1x128xf32, #tpu.memory_space<vmem>>, vector<1x128xf32>
    %6 = vector.broadcast %5 : vector<1x128xf32> to vector<16x128xf32>
    %7 = arith.addf %4, %6 : vector<16x128xf32>
    %c0_5 = arith.constant 0 : index
    %c0_6 = arith.constant 0 : index
    %8 = vector.load %arg4[%c0_5, %c0_6] : memref<16x128xf32, #tpu.memory_space<vmem>>, vector<16x128xf32>
    tpu.vector_store %arg4[%c0_5, %c0_6], %7 {strides = array<i32>} : memref<16x128xf32, #tpu.memory_space<vmem>>, vector<16x128xf32>,
    return
  }
  func.func @transform_0(%arg0: i32) -> (i32, i32) {
    %c0_i32 = arith.constant 0 : i32
    %c0_i32_0 = arith.constant 0 : i32
    return %arg0, %c0_i32 : i32, i32
  }
  func.func @transform_1(%arg0: i32) -> (i32, i32) {
    %c0_i32 = arith.constant 0 : i32
    %c0_i32_0 = arith.constant 0 : i32
    %c0_i32_1 = arith.constant 0 : i32
    return %c0_i32, %c0_i32_0 : i32, i32
  }
  func.func @transform_2(%arg0: i32) -> (i32, i32) {
    %c0_i32 = arith.constant 0 : i32
    %c0_i32_0 = arith.constant 0 : i32
    %c0_i32_1 = arith.constant 0 : i32
    return %c0_i32, %c0_i32_0 : i32, i32
  }
  func.func @transform_3(%arg0: i32) -> (i32, i32) {
    %c0_i32 = arith.constant 0 : i32
    %c0_i32_0 = arith.constant 0 : i32
    return %arg0, %c0_i32 : i32, i32
  }
}

module attributes {stable_mosaic.version = 11 : i64} {
  func.func @skip_linear_kernel(%arg0: i32, %arg1: memref<16x128xf32, #tpu.memory_space<vmem>>, %arg2: memref<128x128xbf16, #tpu.memory_space<vmem>>, %arg3: memref<1x128xf32, #tpu.memory_space<vmem>>, %arg4: memref<16x128xf32, #tpu.memory_space<vmem>>) attributes {dimension_semantics = [#tpu.dimension_semantics<parallel>], iteration_bounds = array<i64: 2>, scalar_prefetch = 0 : i64, scratch_operands = 0 : i64, tpu.core_type = #tpu.core_type<tc>, window_params = [{transform_indices = @transform_0, window_bounds = array<i64: 16, 128>}, {pipeline_mode = #tpu.pipeline_mode<synchronous>, transform_indices = @transform_1, window_bounds = array<i64: 128, 128>}, {pipeline_mode = #tpu.pipeline_mode<synchronous>, transform_indices = @transform_2, window_bounds = array<i64: 1, 128>}, {transform_indices = @transform_3, window_bounds = array<i64: 16, 128>}]} {
    %c0 = arith.constant 0 : index
    %c0_0 = arith.constant 0 : index
    %0 = vector.load %arg1[%c0, %c0_0] : memref<16x128xf32, #tpu.memory_space<vmem>>, vector<16x128xf32>
    %1 = arith.truncf %0 : vector<16x128xf32> to vector<16x128xbf16>
    %c0_1 = arith.constant 0 : index
    %c0_2 = arith.constant 0 : index
    %2 = vector.load %arg2[%c0_1, %c0_2] : memref<128x128xbf16, #tpu.memory_space<vmem>>, vector<128x128xbf16>
    %cst = arith.constant dense<0.000000e+00> : vector<16x128xf32>
    %3 = tpu.matmul %1, %2, %cst {dimension_numbers = #tpu.dot_dimension_numbers<[1], [1], [0], [0], [0, 0, 1, 0], [], []>} : vector<16x128xbf16>, vector<128x128xbf16>, vector<16x128xf32> -> vector<16x128xf32>
    %4 = arith.addf %0, %3 : vector<16x128xf32>
    %c0_3 = arith.constant 0 : index
    %c0_4 = arith.constant 0 : index
    %5 = vector.load %arg3[%c0_3, %c0_4] : memref<1x128xf32, #tpu.memory_space<vmem>>, vector<1x128xf32>
    %6 = vector.broadcast %5 : vector<1x128xf32> to vector<16x128xf32>
    %7 = arith.addf %4, %6 : vector<16x128xf32>
    %c0_5 = arith.constant 0 : index
    %c0_6 = arith.constant 0 : index
    %8 = vector.load %arg4[%c0_5, %c0_6] : memref<16x128xf32, #tpu.memory_space<vmem>>, vector<16x128xf32>
    tpu.vector_store %arg4[%c0_5, %c0_6], %7 {strides = array<i32>} : memref<16x128xf32, #tpu.memory_space<vmem>>, vector<16x128xf32>,
    return
  }
  func.func @transform_0(%arg0: i32) -> (i32, i32) {
    %c0_i32 = arith.constant 0 : i32
    %c0_i32_0 = arith.constant 0 : i32
    return %arg0, %c0_i32 : i32, i32
  }
  func.func @transform_1(%arg0: i32) -> (i32, i32) {
    %c0_i32 = arith.constant 0 : i32
    %c0_i32_0 = arith.constant 0 : i32
    %c0_i32_1 = arith.constant 0 : i32
    return %c0_i32, %c0_i32_0 : i32, i32
  }
  func.func @transform_2(%arg0: i32) -> (i32, i32) {
    %c0_i32 = arith.constant 0 : i32
    %c0_i32_0 = arith.constant 0 : i32
    %c0_i32_1 = arith.constant 0 : i32
    return %c0_i32, %c0_i32_0 : i32, i32
  }
  func.func @transform_3(%arg0: i32) -> (i32, i32) {
    %c0_i32 = arith.constant 0 : i32
    %c0_i32_0 = arith.constant 0 : i32
    return %arg0, %c0_i32 : i32, i32
  }
}

</mosaic_0001>

<llo_original>
// kernel: tpu_custom_call.1
$region0: #{tpu_custom_call.1}
  #allocation0 [shape = 'u32[]', space=smem, size = 0x4, offset = 0x4, fixed_abs, tag = 'smem constant byte address 0x4 - core index']
  #allocation1 [shape = 'u32[144,128]{1,0:T(1,128)}', space=vmem, size = 0x12000, scoped, tag = 'internal scratch']
  %s0 = inlined_call_operand.hbm [shape: f32[32,128], index: 0, kind: input, shape index: {}]
  %s1 = inlined_call_operand.hbm [shape: bf16[128,128], index: 1, kind: input, shape index: {}]
  %s2 = inlined_call_operand.vmem [shape: f32[1,128], index: 2, kind: input, shape index: {}]
  %s3 = inlined_call_operand.hbm [shape: f32[32,128], index: 3, kind: output, shape index: {}]
  %s4 = sld [smem:[#allocation0]]
  $region53: #{tpu_custom_call.1} parent=0
    _
  %s6 = ssub.s32 1, %s4
  %s7 = scalar_select 0, %s6, %s4
  $region1: #{tpu_custom_call.1} parent=0
    #allocation2 [shape = 'u8[16384]{0}', space=vmem, size = 0x4000, scoped, tag = 'input window, operand 0']
    #allocation3 [shape = 's32[2]{0}', space=sflag, size = 0x8, scoped, tag = 'scoped memory for tpu_custom_call.1']
    #allocation4 [shape = 's32[2]{0}', space=sflag, size = 0x8, scoped, tag = 'scoped memory for tpu_custom_call.1']
    #allocation5 [shape = 'u8[32768]{0}', space=vmem, size = 0x8000, scoped, tag = 'input window, operand 1, single buffered']
    #allocation6 [shape = 's32[1]{0}', space=sflag, size = 0x4, scoped, tag = 'scoped memory for tpu_custom_call.1']
    #allocation7 [shape = 'u8[16384]{0}', space=vmem, size = 0x4000, scoped, tag = 'output window, operand 0']
    %8 = vsyncpa [#allocation3], 0
    %s9 = scalar_lea.sflag [#allocation3], 1
    %10 = vsyncpa %s9, 0
    %11 = vsyncpa [#allocation6], 0
    %12 = vsyncpa [#allocation4], 0
    %s13 = scalar_lea.sflag [#allocation4], 1
    %14 = vsyncpa %s13, 0
    loop: start=0, step=1, limit=4
    $region2: #{tpu_custom_call.1} parent=1 // loop_pre_header
      _
    $region3: #{tpu_custom_call.1} parent=1 // loop_header
      %s16 = sphi 0, %s20
      %p17 = scmp.ge.s32.totalorder %s16, 4
      %s26 = sphi 0, %s28
      %s29 = sphi 0, %s26
      %s30 = sphi 0, %s29
      %s46 = sphi 0, %s30
      %s50 = sphi 0, %s50
      %s52 = sphi 0, %s50
      %s53 = sphi 0, %s52
      %s67 = sphi 0, %s53
      %s71 = sphi 0, %s71
      %s73 = sphi 0, %s71
      %s74 = sphi 0, %s73
      %s88 = sphi 0, %s74
      %s94 = sphi 0, %s96
      %s97 = sphi 0, %s94
      %s98 = sphi 0, %s97
      %s114 = sphi 0, %s98
    $region4: #{tpu_custom_call.1} parent=1 // loop_header_branch
      %19 = sbr.rel (%p17) target = $region8
    $region5: #{tpu_custom_call.1} parent=1 // loop_body
      %s21 = ssub.s32 %s16, 1
      %s22 = ssub.s32 %s16, 2
      %s23 = sadd.s32 %s16, 1
      %s24 = ssub.s32 %s16, %s23
      %p25 = scmp.eq.s32.totalorder %s24, 0
      %s27 = sadd.s32 %s26, 1
      %s28 = scalar_select %p25, %s26, %s27
      %p31 = pneg %p25
      %p32 = scmp.eq.s32.totalorder %s16, 1
      %p33 = por %p31, %p32
      %p34 = scmp.ne.s32.totalorder %s26, %s29
      %p35 = scmp.eq.s32.totalorder %s16, 0
      %p36 = por %p34, %p35
      %p37 = scmp.ne.s32.totalorder %s26, %s29
      %p38 = scmp.eq.s32.totalorder %s21, 1
      %p39 = por %p37, %p38
      %p40 = scmp.ne.s32.totalorder %s29, %s30
      %p41 = scmp.eq.s32.totalorder %s21, 0
      %p42 = por %p40, %p41
      %p43 = scmp.ne.s32.totalorder %s29, %s30
      %p44 = scmp.eq.s32.totalorder %s22, 1
      %p45 = por %p43, %p44
      %p47 = scmp.ne.s32.totalorder %s30, %s46
      %p48 = scmp.eq.s32.totalorder %s22, 0
      %p49 = por %p47, %p48
      %s51 = sadd.s32 %s50, 1
      %p54 = scmp.eq.s32.totalorder %s16, 1
      %p55 = scmp.ne.s32.totalorder %s50, %s52
      %p56 = scmp.eq.s32.totalorder %s16, 0
      %p57 = por %p55, %p56
      %p58 = scmp.ne.s32.totalorder %s50, %s52
      %p59 = scmp.eq.s32.totalorder %s21, 1
      %p60 = por %p58, %p59
      %p61 = scmp.ne.s32.totalorder %s52, %s53
      %p62 = scmp.eq.s32.totalorder %s21, 0
      %p63 = por %p61, %p62
      %p64 = scmp.ne.s32.totalorder %s52, %s53
      %p65 = scmp.eq.s32.totalorder %s22, 1
      %p66 = por %p64, %p65
      %p68 = scmp.ne.s32.totalorder %s53, %s67
      %p69 = scmp.eq.s32.totalorder %s22, 0
      %p70 = por %p68, %p69
      %s72 = sadd.s32 %s71, 1
      %p75 = scmp.eq.s32.totalorder %s16, 1
      %p76 = scmp.ne.s32.totalorder %s71, %s73
      %p77 = scmp.eq.s32.totalorder %s16, 0
      %p78 = por %p76, %p77
      %p79 = scmp.ne.s32.totalorder %s71, %s73
      %p80 = scmp.eq.s32.totalorder %s21, 1
      %p81 = por %p79, %p80
      %p82 = scmp.ne.s32.totalorder %s73, %s74
      %p83 = scmp.eq.s32.totalorder %s21, 0
      %p84 = por %p82, %p83
      %p85 = scmp.ne.s32.totalorder %s73, %s74
      %p86 = scmp.eq.s32.totalorder %s22, 1
      %p87 = por %p85, %p86
      %p89 = scmp.ne.s32.totalorder %s74, %s88
      %p90 = scmp.eq.s32.totalorder %s22, 0
      %p91 = por %p89, %p90
      %s92 = ssub.s32 %s16, %s23
      %p93 = scmp.eq.s32.totalorder %s92, 0
      %s95 = sadd.s32 %s94, 1
      %s96 = scalar_select %p93, %s94, %s95
      %p99 = pneg %p93
      %p100 = scmp.eq.s32.totalorder %s16, 1
      %p101 = por %p99, %p100
      %p102 = scmp.ne.s32.totalorder %s94, %s97
      %p103 = scmp.eq.s32.totalorder %s16, 0
      %p104 = por %p102, %p103
      %p105 = scmp.ne.s32.totalorder %s94, %s97
      %p106 = scmp.eq.s32.totalorder %s21, 1
      %p107 = por %p105, %p106
      %p108 = scmp.ne.s32.totalorder %s97, %s98
      %p109 = scmp.eq.s32.totalorder %s21, 0
      %p110 = por %p108, %p109
      %p111 = scmp.ne.s32.totalorder %s97, %s98
      %p112 = scmp.eq.s32.totalorder %s22, 1
      %p113 = por %p111, %p112
      %p115 = scmp.ne.s32.totalorder %s98, %s114
      %p116 = scmp.eq.s32.totalorder %s22, 0
      %p117 = por %p115, %p116
      %p118 = scmp.le.s32.totalorder 1, %s16
      %p119 = scmp.lt.s32.totalorder %s16, 3
      %p120 = pnand %p118, %p119
      %p121 = pneg %p120
      // Predicated region
      $region9: #{tpu_custom_call.1} parent=5 // pred_check
        _
      $region10: #{tpu_custom_call.1} parent=5 // pred_check_branch
        %123 = sbr.rel (%p120) target = $region12
      $region11: #{tpu_custom_call.1} parent=5 // pred_region
        %s124 = ssub.s32 %s16, 1
        // Predicated region
        $region13: #{tpu_custom_call.1} parent=11 // pred_check
          %p125 = pneg %p63
        $region14: #{tpu_custom_call.1} parent=11 // pred_check_branch
          %127 = sbr.rel (%p125) target = $region16
        $region15: #{tpu_custom_call.1} parent=11 // pred_region
          %s129 = ssub.s32 1024, 1024
          %130 = vsyncadd [#allocation6], %s129
          %s131 = sshll.u32 [#allocation5], 4
          %s132 = int_to_ptr.vmem [resolvable:$true] %s131
          %137 = dma.hbm_to_vmem [thread:$0]  %s1, 1024, %s132, [#allocation6], 64, 64, 4
        $region16: #{tpu_custom_call.1} parent=11 // pred_fallthru
          _
        // Predicated region
        $region17: #{tpu_custom_call.1} parent=11 // pred_check
          %p138 = pneg %p84
        $region18: #{tpu_custom_call.1} parent=11 // pred_check_branch
          %140 = sbr.rel (%p138) target = $region20
        $region19: #{tpu_custom_call.1} parent=11 // pred_region
          _
        $region20: #{tpu_custom_call.1} parent=11 // pred_fallthru
          _
      $region12: #{tpu_custom_call.1} parent=5 // pred_fallthru
        _
      %p141 = scmp.lt.s32.totalorder %s16, 2
      // Predicated region
      $region21: #{tpu_custom_call.1} parent=5 // pred_check
        %p142 = pneg %p141
      $region22: #{tpu_custom_call.1} parent=5 // pred_check_branch
        %144 = sbr.rel (%p142) target = $region24
      $region23: #{tpu_custom_call.1} parent=5 // pred_region
        // Predicated region
        $region25: #{tpu_custom_call.1} parent=23 // pred_check
          %p145 = pneg %p36
        $region26: #{tpu_custom_call.1} parent=23 // pred_check_branch
          %147 = sbr.rel (%p145) target = $region28
        $region27: #{tpu_custom_call.1} parent=23 // pred_region
          %s148 = sand.u32 %s26, 1
          %s149 = scalar_lea.sflag [#allocation3], %s148
          %s150 = sand.u32 %s26, 1
          %s151 = smul.addr %s150, 16
          %s152 = scalar_lea.vmem [#allocation2], %s151
          %s153 = smul.u32 2, %s16
          %s155 = ssub.s32 256, 256
          %156 = vsyncadd %s149, %s155
          %s157 = smul.addr %s153, 128
          %s158 = scalar_lea.hbm %s0, %s157
          %s159 = sshll.u32 %s152, 4
          %s160 = int_to_ptr.vmem [resolvable:$true] %s159
          %165 = dma.hbm_to_vmem [thread:$0]  %s158, 256, %s160, %s149, 128, 128, 8
        $region28: #{tpu_custom_call.1} parent=23 // pred_fallthru
          _
      $region24: #{tpu_custom_call.1} parent=5 // pred_fallthru
        _
      %p166 = scmp.le.s32.totalorder 1, %s16
      %p167 = scmp.lt.s32.totalorder %s16, 3
      %p168 = pnand %p166, %p167
      %p169 = pneg %p168
      // Predicated region
      $region29: #{tpu_custom_call.1} parent=5 // pred_check
        _
      $region30: #{tpu_custom_call.1} parent=5 // pred_check_branch
        %171 = sbr.rel (%p168) target = $region32
      $region31: #{tpu_custom_call.1} parent=5 // pred_region
        %s172 = ssub.s32 %s16, 1
        %s173 = sand.u32 %s29, 1
        %s174 = scalar_lea.sflag [#allocation3], %s173
        %s175 = sand.u32 %s29, 1
        %s176 = smul.addr %s175, 16
        %s177 = scalar_lea.vmem [#allocation2], %s176
        // Predicated region
        $region33: #{tpu_custom_call.1} parent=31 // pred_check
          %p178 = pneg %p42
        $region34: #{tpu_custom_call.1} parent=31 // pred_check_branch
          %180 = sbr.rel (%p178) target = $region36
        $region35: #{tpu_custom_call.1} parent=31 // pred_region
          %181 = dma.done %s174, 256
        $region36: #{tpu_custom_call.1} parent=31 // pred_fallthru
          _
        // Predicated region
        $region37: #{tpu_custom_call.1} parent=31 // pred_check
          %p182 = pneg %p63
        $region38: #{tpu_custom_call.1} parent=31 // pred_check_branch
          %184 = sbr.rel (%p182) target = $region40
        $region39: #{tpu_custom_call.1} parent=31 // pred_region
          %185 = dma.done [#allocation6], 1024
        $region40: #{tpu_custom_call.1} parent=31 // pred_fallthru
          _
        %s186 = sand.u32 %s29, 1
        %s187 = scalar_lea.sflag [#allocation3], %s186
        %s188 = sand.u32 %s29, 1
        %s189 = smul.addr %s188, 16
        %s190 = scalar_lea.vmem [#allocation2], %s189
        %p191 = pneg %p42
        %p192 = pneg %p39
        %p193 = pneg %p63
        %p194 = pneg %p60
        %p195 = pneg %p84
        %p196 = pneg %p81
        %p197 = pneg %p110
        %p198 = pneg %p107
        %s199 = sand.u32 %s97, 1
        %s200 = scalar_lea.sflag [#allocation4], %s199
        %s201 = sand.u32 %s97, 1
        %s202 = smul.addr %s201, 16
        %s203 = scalar_lea.vmem [#allocation7], %s202
        %s204 = smul.u32 2, %s21
        %s205 = smul.u32 2, %s21
        %v207 = vld [vmem:[%s177] sm:$0xff]
        %v208 = vld [vmem:[%s177 + $0x8] sm:$0xff]
        %v209 = vpack.c.bf16 %v208, %v207
        %v210 = vld [vmem:[#allocation5] sm:$0xf]
        %v211 = vld [vmem:[#allocation5 + $0x4] sm:$0xf]
        %v212 = vld [vmem:[#allocation5 + $0x8] sm:$0xf]
        %v213 = vld [vmem:[#allocation5 + $0xc] sm:$0xf]
        %v214 = vld [vmem:[#allocation5 + $0x10] sm:$0xf]
        %v215 = vld [vmem:[#allocation5 + $0x14] sm:$0xf]
        %v216 = vld [vmem:[#allocation5 + $0x18] sm:$0xf]
        %v217 = vld [vmem:[#allocation5 + $0x1c] sm:$0xf]
        %v218 = vld [vmem:[#allocation5 + $0x20] sm:$0xf]
        %v219 = vld [vmem:[#allocation5 + $0x24] sm:$0xf]
        %v220 = vld [vmem:[#allocation5 + $0x28] sm:$0xf]
        %v221 = vld [vmem:[#allocation5 + $0x2c] sm:$0xf]
        %v222 = vld [vmem:[#allocation5 + $0x30] sm:$0xf]
        %v223 = vld [vmem:[#allocation5 + $0x34] sm:$0xf]
        %v224 = vld [vmem:[#allocation5 + $0x38] sm:$0xf]
        %v225 = vld [vmem:[#allocation5 + $0x3c] sm:$0xf]
        %v242 = vunpack.c.l.b16 %v210
        %v243 = vunpack.c.l.b16 %v211
        %v244 = vunpack.c.l.b16 %v212
        %v245 = vunpack.c.l.b16 %v213
        %v246 = vunpack.c.l.b16 %v214
        %v247 = vunpack.c.l.b16 %v215
        %v248 = vunpack.c.l.b16 %v216
        %v249 = vunpack.c.l.b16 %v217
        %v250 = vunpack.c.l.b16 %v218
        %v251 = vunpack.c.l.b16 %v219
        %v252 = vunpack.c.l.b16 %v220
        %v253 = vunpack.c.l.b16 %v221
        %v254 = vunpack.c.l.b16 %v222
        %v255 = vunpack.c.l.b16 %v223
        %v256 = vunpack.c.l.b16 %v224
        %v257 = vunpack.c.l.b16 %v225
        %v258 = vpack.c.b16 %v243, %v242
        %v259 = vpack.c.b16 %v245, %v244
        %v260 = vpack.c.b16 %v247, %v246
        %v261 = vpack.c.b16 %v249, %v248
        %v262 = vpack.c.b16 %v251, %v250
        %v263 = vpack.c.b16 %v253, %v252
        %v264 = vpack.c.b16 %v255, %v254
        %v265 = vpack.c.b16 %v257, %v256
        %274 = vmatprep.subr.bf16.mxu0 0
        %275 = vmatpush1.bf16.xpose.msra.mxu0 %v258
        %276 = vmatprep.subr.bf16.mxu0 0
        %277 = vmatpush1.bf16.xpose.msra.mxu0 %v259
        %278 = vmatprep.subr.bf16.mxu0 0
        %279 = vmatpush1.bf16.xpose.msra.mxu0 %v260
        %280 = vmatprep.subr.bf16.mxu0 0
        %281 = vmatpush1.bf16.xpose.msra.mxu0 %v261
        %282 = vmatprep.subr.bf16.mxu0 0
        %283 = vmatpush1.bf16.xpose.msra.mxu0 %v262
        %284 = vmatprep.subr.bf16.mxu0 0
        %285 = vmatpush1.bf16.xpose.msra.mxu0 %v263
        %286 = vmatprep.subr.bf16.mxu0 0
        %287 = vmatpush1.bf16.xpose.msra.mxu0 %v264
        %288 = vmatprep.subr.bf16.mxu0 0
        %289 = vmatpush1.bf16.xpose.msra.mxu0 %v265
        %290 = vmatprep.subr.bf16.mxu0 0
        %291 = vmatpush1.bf16.xpose.msra.mxu0 0
        %292 = vmatprep.subr.bf16.mxu0 0
        %293 = vmatpush1.bf16.xpose.msra.mxu0 0
        %294 = vmatprep.subr.bf16.mxu0 0
        %295 = vmatpush1.bf16.xpose.msra.mxu0 0
        %296 = vmatprep.subr.bf16.mxu0 0
        %297 = vmatpush1.bf16.xpose.msra.mxu0 0
        %298 = vmatprep.subr.bf16.mxu0 0
        %299 = vmatpush1.bf16.xpose.msra.mxu0 0
        %300 = vmatprep.subr.bf16.mxu0 0
        %301 = vmatpush1.bf16.xpose.msra.mxu0 0
        %302 = vmatprep.subr.bf16.mxu0 0
        %303 = vmatpush1.bf16.xpose.msra.mxu0 0
        %304 = vmatprep.subr.bf16.mxu0 0
        %305 = vmatpush1.bf16.xpose.msra.mxu0 0
        %306 = vmatprep.mubr.bf16.mxu0 0
        %307 = vmatmul.mubr.bf16.gmra.mrb[0].mxu0 %v209
        %v308 = vpop.f32.mrb[0].mxu0
        %v309 = vadd.f32 0.0, %v308
        %v310 = vpop.f32.mrb[0].mxu0
        %v311 = vpop.f32.mrb[0].mxu0
        %v312 = vadd.f32 0.0, %v311
        %v313 = vpop.f32.mrb[0].mxu0
        %314 = vdwg.mxu0
        %v315 = vadd.f32 %v207, %v309
        %v316 = vadd.f32 %v208, %v312
        %v317 = vld [vmem:[%s2] sm:$0x1]
        %v319 = vlaneseq
        %v320 = vshrl.u32 %v319, 7
        %v321 = vsub.s32 0, %v320
        %v322 = vrot.slane %v317, %v321
        %v324 = vadd.f32 %v315, %v322
        %v325 = vadd.f32 %v316, %v322
        %326 = vst [vmem:[%s203] sm:$0xff] %v324
        %327 = vst [vmem:[%s203 + $0x8] sm:$0xff] %v325
        %s328 = sand.u32 %s97, 1
        %s329 = scalar_lea.sflag [#allocation4], %s328
        %s330 = sand.u32 %s97, 1
        %s331 = smul.addr %s330, 16
        %s332 = scalar_lea.vmem [#allocation7], %s331
        // Predicated region
        $region41: #{tpu_custom_call.1} parent=31 // pred_check
          %p333 = pneg %p107
        $region42: #{tpu_custom_call.1} parent=31 // pred_check_branch
          %335 = sbr.rel (%p333) target = $region44
        $region43: #{tpu_custom_call.1} parent=31 // pred_region
          %s336 = smul.u32 2, %s21
          %s338 = ssub.s32 256, 256
          %339 = vsyncadd %s329, %s338
          %s340 = smul.addr %s336, 128
          %s341 = scalar_lea.hbm %s3, %s340
          %s342 = sshll.u32 %s332, 4
          %s343 = int_to_ptr.vmem [resolvable:$true] %s342
          %348 = dma.vmem_to_hbm [thread:$0]  %s343, 256, %s341, %s329, 128, 128, 8
        $region44: #{tpu_custom_call.1} parent=31 // pred_fallthru
          _
      $region32: #{tpu_custom_call.1} parent=5 // pred_fallthru
        _
      %p349 = scmp.le.s32.totalorder 2, %s16
      // Predicated region
      $region45: #{tpu_custom_call.1} parent=5 // pred_check
        %p350 = pneg %p349
      $region46: #{tpu_custom_call.1} parent=5 // pred_check_branch
        %352 = sbr.rel (%p350) target = $region48
      $region47: #{tpu_custom_call.1} parent=5 // pred_region
        %s353 = ssub.s32 %s16, 2
        // Predicated region
        $region49: #{tpu_custom_call.1} parent=47 // pred_check
          %p354 = pneg %p113
        $region50: #{tpu_custom_call.1} parent=47 // pred_check_branch
          %356 = sbr.rel (%p354) target = $region52
        $region51: #{tpu_custom_call.1} parent=47 // pred_region
          %s357 = sand.u32 %s98, 1
          %s358 = scalar_lea.sflag [#allocation4], %s357
          %s359 = sand.u32 %s98, 1
          %s360 = smul.addr %s359, 16
          %s361 = scalar_lea.vmem [#allocation7], %s360
          %362 = dma.done %s358, 256
        $region52: #{tpu_custom_call.1} parent=47 // pred_fallthru
          _
      $region48: #{tpu_custom_call.1} parent=5 // pred_fallthru
        _
    $region6: #{tpu_custom_call.1} parent=1 // loop_footer
      %s20 = sadd.s32 1, %s16
    $region7: #{tpu_custom_call.1} parent=1 // loop_footer_branch
      %15 = sbr.rel target = $region3
    $region8: #{tpu_custom_call.1} parent=1 // loop_exit
      _
    %363 = vsyncpa [#allocation3], 1
    %s364 = scalar_lea.sflag [#allocation3], 1
    %365 = vsyncpa %s364, 1
    %366 = vsyncpa [#allocation6], 1
    %367 = vsyncpa [#allocation4], 1
    %s368 = scalar_lea.sflag [#allocation4], 1
    %369 = vsyncpa %s368, 1

// kernel: tpu_custom_call.1
$region0: #{tpu_custom_call.1}
  #allocation0 [shape = 'u32[]', space=smem, size = 0x4, offset = 0x4, fixed_abs, tag = 'smem constant byte address 0x4 - core index']
  #allocation1 [shape = 'u32[144,128]{1,0:T(1,128)}', space=vmem, size = 0x12000, scoped, tag = 'internal scratch']
  %s0 = inlined_call_operand.hbm [shape: f32[32,128], index: 0, kind: input, shape index: {}]
  %s1 = inlined_call_operand.hbm [shape: bf16[128,128], index: 1, kind: input, shape index: {}]
  %s2 = inlined_call_operand.vmem [shape: f32[1,128], index: 2, kind: input, shape index: {}]
  %s3 = inlined_call_operand.hbm [shape: f32[32,128], index: 3, kind: output, shape index: {}]
  %s4 = sld [smem:[#allocation0]]
  $region53: #{tpu_custom_call.1} parent=0
    _
  %s6 = ssub.s32 1, %s4
  %s7 = scalar_select 0, %s6, %s4
  $region1: #{tpu_custom_call.1} parent=0
    #allocation2 [shape = 'u8[16384]{0}', space=vmem, size = 0x4000, scoped, tag = 'input window, operand 0']
    #allocation3 [shape = 's32[2]{0}', space=sflag, size = 0x8, scoped, tag = 'scoped memory for tpu_custom_call.1']
    #allocation4 [shape = 's32[2]{0}', space=sflag, size = 0x8, scoped, tag = 'scoped memory for tpu_custom_call.1']
    #allocation5 [shape = 'u8[32768]{0}', space=vmem, size = 0x8000, scoped, tag = 'input window, operand 1, single buffered']
    #allocation6 [shape = 's32[1]{0}', space=sflag, size = 0x4, scoped, tag = 'scoped memory for tpu_custom_call.1']
    #allocation7 [shape = 'u8[16384]{0}', space=vmem, size = 0x4000, scoped, tag = 'output window, operand 0']
    %8 = vsyncpa [#allocation3], 0
    %s9 = scalar_lea.sflag [#allocation3], 1
    %10 = vsyncpa %s9, 0
    %11 = vsyncpa [#allocation6], 0
    %12 = vsyncpa [#allocation4], 0
    %s13 = scalar_lea.sflag [#allocation4], 1
    %14 = vsyncpa %s13, 0
    loop: start=0, step=1, limit=4
    $region2: #{tpu_custom_call.1} parent=1 // loop_pre_header
      _
    $region3: #{tpu_custom_call.1} parent=1 // loop_header
      %s16 = sphi 0, %s20
      %p17 = scmp.ge.s32.totalorder %s16, 4
      %s26 = sphi 0, %s28
      %s29 = sphi 0, %s26
      %s30 = sphi 0, %s29
      %s46 = sphi 0, %s30
      %s50 = sphi 0, %s50
      %s52 = sphi 0, %s50
      %s53 = sphi 0, %s52
      %s67 = sphi 0, %s53
      %s71 = sphi 0, %s71
      %s73 = sphi 0, %s71
      %s74 = sphi 0, %s73
      %s88 = sphi 0, %s74
      %s94 = sphi 0, %s96
      %s97 = sphi 0, %s94
      %s98 = sphi 0, %s97
      %s114 = sphi 0, %s98
    $region4: #{tpu_custom_call.1} parent=1 // loop_header_branch
      %19 = sbr.rel (%p17) target = $region8
    $region5: #{tpu_custom_call.1} parent=1 // loop_body
      %s21 = ssub.s32 %s16, 1
      %s22 = ssub.s32 %s16, 2
      %s23 = sadd.s32 %s16, 1
      %s24 = ssub.s32 %s16, %s23
      %p25 = scmp.eq.s32.totalorder %s24, 0
      %s27 = sadd.s32 %s26, 1
      %s28 = scalar_select %p25, %s26, %s27
      %p31 = pneg %p25
      %p32 = scmp.eq.s32.totalorder %s16, 1
      %p33 = por %p31, %p32
      %p34 = scmp.ne.s32.totalorder %s26, %s29
      %p35 = scmp.eq.s32.totalorder %s16, 0
      %p36 = por %p34, %p35
      %p37 = scmp.ne.s32.totalorder %s26, %s29
      %p38 = scmp.eq.s32.totalorder %s21, 1
      %p39 = por %p37, %p38
      %p40 = scmp.ne.s32.totalorder %s29, %s30
      %p41 = scmp.eq.s32.totalorder %s21, 0
      %p42 = por %p40, %p41
      %p43 = scmp.ne.s32.totalorder %s29, %s30
      %p44 = scmp.eq.s32.totalorder %s22, 1
      %p45 = por %p43, %p44
      %p47 = scmp.ne.s32.totalorder %s30, %s46
      %p48 = scmp.eq.s32.totalorder %s22, 0
      %p49 = por %p47, %p48
      %s51 = sadd.s32 %s50, 1
      %p54 = scmp.eq.s32.totalorder %s16, 1
      %p55 = scmp.ne.s32.totalorder %s50, %s52
      %p56 = scmp.eq.s32.totalorder %s16, 0
      %p57 = por %p55, %p56
      %p58 = scmp.ne.s32.totalorder %s50, %s52
      %p59 = scmp.eq.s32.totalorder %s21, 1
      %p60 = por %p58, %p59
      %p61 = scmp.ne.s32.totalorder %s52, %s53
      %p62 = scmp.eq.s32.totalorder %s21, 0
      %p63 = por %p61, %p62
      %p64 = scmp.ne.s32.totalorder %s52, %s53
      %p65 = scmp.eq.s32.totalorder %s22, 1
      %p66 = por %p64, %p65
      %p68 = scmp.ne.s32.totalorder %s53, %s67
      %p69 = scmp.eq.s32.totalorder %s22, 0
      %p70 = por %p68, %p69
      %s72 = sadd.s32 %s71, 1
      %p75 = scmp.eq.s32.totalorder %s16, 1
      %p76 = scmp.ne.s32.totalorder %s71, %s73
      %p77 = scmp.eq.s32.totalorder %s16, 0
      %p78 = por %p76, %p77
      %p79 = scmp.ne.s32.totalorder %s71, %s73
      %p80 = scmp.eq.s32.totalorder %s21, 1
      %p81 = por %p79, %p80
      %p82 = scmp.ne.s32.totalorder %s73, %s74
      %p83 = scmp.eq.s32.totalorder %s21, 0
      %p84 = por %p82, %p83
      %p85 = scmp.ne.s32.totalorder %s73, %s74
      %p86 = scmp.eq.s32.totalorder %s22, 1
      %p87 = por %p85, %p86
      %p89 = scmp.ne.s32.totalorder %s74, %s88
      %p90 = scmp.eq.s32.totalorder %s22, 0
      %p91 = por %p89, %p90
      %s92 = ssub.s32 %s16, %s23
      %p93 = scmp.eq.s32.totalorder %s92, 0
      %s95 = sadd.s32 %s94, 1
      %s96 = scalar_select %p93, %s94, %s95
      %p99 = pneg %p93
      %p100 = scmp.eq.s32.totalorder %s16, 1
      %p101 = por %p99, %p100
      %p102 = scmp.ne.s32.totalorder %s94, %s97
      %p103 = scmp.eq.s32.totalorder %s16, 0
      %p104 = por %p102, %p103
      %p105 = scmp.ne.s32.totalorder %s94, %s97
      %p106 = scmp.eq.s32.totalorder %s21, 1
      %p107 = por %p105, %p106
      %p108 = scmp.ne.s32.totalorder %s97, %s98
      %p109 = scmp.eq.s32.totalorder %s21, 0
      %p110 = por %p108, %p109
      %p111 = scmp.ne.s32.totalorder %s97, %s98
      %p112 = scmp.eq.s32.totalorder %s22, 1
      %p113 = por %p111, %p112
      %p115 = scmp.ne.s32.totalorder %s98, %s114
      %p116 = scmp.eq.s32.totalorder %s22, 0
      %p117 = por %p115, %p116
      %p118 = scmp.le.s32.totalorder 1, %s16
      %p119 = scmp.lt.s32.totalorder %s16, 3
      %p120 = pnand %p118, %p119
      %p121 = pneg %p120
      // Predicated region
      $region9: #{tpu_custom_call.1} parent=5 // pred_check
        _
      $region10: #{tpu_custom_call.1} parent=5 // pred_check_branch
        %123 = sbr.rel (%p120) target = $region12
      $region11: #{tpu_custom_call.1} parent=5 // pred_region
        %s124 = ssub.s32 %s16, 1
        // Predicated region
        $region13: #{tpu_custom_call.1} parent=11 // pred_check
          %p125 = pneg %p63
        $region14: #{tpu_custom_call.1} parent=11 // pred_check_branch
          %127 = sbr.rel (%p125) target = $region16
        $region15: #{tpu_custom_call.1} parent=11 // pred_region
          %s129 = ssub.s32 1024, 1024
          %130 = vsyncadd [#allocation6], %s129
          %s131 = sshll.u32 [#allocation5], 4
          %s132 = int_to_ptr.vmem [resolvable:$true] %s131
          %137 = dma.hbm_to_vmem [thread:$0]  %s1, 1024, %s132, [#allocation6], 64, 64, 4
        $region16: #{tpu_custom_call.1} parent=11 // pred_fallthru
          _
        // Predicated region
        $region17: #{tpu_custom_call.1} parent=11 // pred_check
          %p138 = pneg %p84
        $region18: #{tpu_custom_call.1} parent=11 // pred_check_branch
          %140 = sbr.rel (%p138) target = $region20
        $region19: #{tpu_custom_call.1} parent=11 // pred_region
          _
        $region20: #{tpu_custom_call.1} parent=11 // pred_fallthru
          _
      $region12: #{tpu_custom_call.1} parent=5 // pred_fallthru
        _
      %p141 = scmp.lt.s32.totalorder %s16, 2
      // Predicated region
      $region21: #{tpu_custom_call.1} parent=5 // pred_check
        %p142 = pneg %p141
      $region22: #{tpu_custom_call.1} parent=5 // pred_check_branch
        %144 = sbr.rel (%p142) target = $region24
      $region23: #{tpu_custom_call.1} parent=5 // pred_region
        // Predicated region
        $region25: #{tpu_custom_call.1} parent=23 // pred_check
          %p145 = pneg %p36
        $region26: #{tpu_custom_call.1} parent=23 // pred_check_branch
          %147 = sbr.rel (%p145) target = $region28
        $region27: #{tpu_custom_call.1} parent=23 // pred_region
          %s148 = sand.u32 %s26, 1
          %s149 = scalar_lea.sflag [#allocation3], %s148
          %s150 = sand.u32 %s26, 1
          %s151 = smul.addr %s150, 16
          %s152 = scalar_lea.vmem [#allocation2], %s151
          %s153 = smul.u32 2, %s16
          %s155 = ssub.s32 256, 256
          %156 = vsyncadd %s149, %s155
          %s157 = smul.addr %s153, 128
          %s158 = scalar_lea.hbm %s0, %s157
          %s159 = sshll.u32 %s152, 4
          %s160 = int_to_ptr.vmem [resolvable:$true] %s159
          %165 = dma.hbm_to_vmem [thread:$0]  %s158, 256, %s160, %s149, 128, 128, 8
        $region28: #{tpu_custom_call.1} parent=23 // pred_fallthru
          _
      $region24: #{tpu_custom_call.1} parent=5 // pred_fallthru
        _
      %p166 = scmp.le.s32.totalorder 1, %s16
      %p167 = scmp.lt.s32.totalorder %s16, 3
      %p168 = pnand %p166, %p167
      %p169 = pneg %p168
      // Predicated region
      $region29: #{tpu_custom_call.1} parent=5 // pred_check
        _
      $region30: #{tpu_custom_call.1} parent=5 // pred_check_branch
        %171 = sbr.rel (%p168) target = $region32
      $region31: #{tpu_custom_call.1} parent=5 // pred_region
        %s172 = ssub.s32 %s16, 1
        %s173 = sand.u32 %s29, 1
        %s174 = scalar_lea.sflag [#allocation3], %s173
        %s175 = sand.u32 %s29, 1
        %s176 = smul.addr %s175, 16
        %s177 = scalar_lea.vmem [#allocation2], %s176
        // Predicated region
        $region33: #{tpu_custom_call.1} parent=31 // pred_check
          %p178 = pneg %p42
        $region34: #{tpu_custom_call.1} parent=31 // pred_check_branch
          %180 = sbr.rel (%p178) target = $region36
        $region35: #{tpu_custom_call.1} parent=31 // pred_region
          %181 = dma.done %s174, 256
        $region36: #{tpu_custom_call.1} parent=31 // pred_fallthru
          _
        // Predicated region
        $region37: #{tpu_custom_call.1} parent=31 // pred_check
          %p182 = pneg %p63
        $region38: #{tpu_custom_call.1} parent=31 // pred_check_branch
          %184 = sbr.rel (%p182) target = $region40
        $region39: #{tpu_custom_call.1} parent=31 // pred_region
          %185 = dma.done [#allocation6], 1024
        $region40: #{tpu_custom_call.1} parent=31 // pred_fallthru
          _
        %s186 = sand.u32 %s29, 1
        %s187 = scalar_lea.sflag [#allocation3], %s186
        %s188 = sand.u32 %s29, 1
        %s189 = smul.addr %s188, 16
        %s190 = scalar_lea.vmem [#allocation2], %s189
        %p191 = pneg %p42
        %p192 = pneg %p39
        %p193 = pneg %p63
        %p194 = pneg %p60
        %p195 = pneg %p84
        %p196 = pneg %p81
        %p197 = pneg %p110
        %p198 = pneg %p107
        %s199 = sand.u32 %s97, 1
        %s200 = scalar_lea.sflag [#allocation4], %s199
        %s201 = sand.u32 %s97, 1
        %s202 = smul.addr %s201, 16
        %s203 = scalar_lea.vmem [#allocation7], %s202
        %s204 = smul.u32 2, %s21
        %s205 = smul.u32 2, %s21
        %v207 = vld [vmem:[%s177] sm:$0xff]
        %v208 = vld [vmem:[%s177 + $0x8] sm:$0xff]
        %v209 = vpack.c.bf16 %v208, %v207
        %v210 = vld [vmem:[#allocation5] sm:$0xf]
        %v211 = vld [vmem:[#allocation5 + $0x4] sm:$0xf]
        %v212 = vld [vmem:[#allocation5 + $0x8] sm:$0xf]
        %v213 = vld [vmem:[#allocation5 + $0xc] sm:$0xf]
        %v214 = vld [vmem:[#allocation5 + $0x10] sm:$0xf]
        %v215 = vld [vmem:[#allocation5 + $0x14] sm:$0xf]
        %v216 = vld [vmem:[#allocation5 + $0x18] sm:$0xf]
        %v217 = vld [vmem:[#allocation5 + $0x1c] sm:$0xf]
        %v218 = vld [vmem:[#allocation5 + $0x20] sm:$0xf]
        %v219 = vld [vmem:[#allocation5 + $0x24] sm:$0xf]
        %v220 = vld [vmem:[#allocation5 + $0x28] sm:$0xf]
        %v221 = vld [vmem:[#allocation5 + $0x2c] sm:$0xf]
        %v222 = vld [vmem:[#allocation5 + $0x30] sm:$0xf]
        %v223 = vld [vmem:[#allocation5 + $0x34] sm:$0xf]
        %v224 = vld [vmem:[#allocation5 + $0x38] sm:$0xf]
        %v225 = vld [vmem:[#allocation5 + $0x3c] sm:$0xf]
        %v242 = vunpack.c.l.b16 %v210
        %v243 = vunpack.c.l.b16 %v211
        %v244 = vunpack.c.l.b16 %v212
        %v245 = vunpack.c.l.b16 %v213
        %v246 = vunpack.c.l.b16 %v214
        %v247 = vunpack.c.l.b16 %v215
        %v248 = vunpack.c.l.b16 %v216
        %v249 = vunpack.c.l.b16 %v217
        %v250 = vunpack.c.l.b16 %v218
        %v251 = vunpack.c.l.b16 %v219
        %v252 = vunpack.c.l.b16 %v220
        %v253 = vunpack.c.l.b16 %v221
        %v254 = vunpack.c.l.b16 %v222
        %v255 = vunpack.c.l.b16 %v223
        %v256 = vunpack.c.l.b16 %v224
        %v257 = vunpack.c.l.b16 %v225
        %v258 = vpack.c.b16 %v243, %v242
        %v259 = vpack.c.b16 %v245, %v244
        %v260 = vpack.c.b16 %v247, %v246
        %v261 = vpack.c.b16 %v249, %v248
        %v262 = vpack.c.b16 %v251, %v250
        %v263 = vpack.c.b16 %v253, %v252
        %v264 = vpack.c.b16 %v255, %v254
        %v265 = vpack.c.b16 %v257, %v256
        %274 = vmatprep.subr.bf16.mxu0 0
        %275 = vmatpush1.bf16.xpose.msra.mxu0 %v258
        %276 = vmatprep.subr.bf16.mxu0 0
        %277 = vmatpush1.bf16.xpose.msra.mxu0 %v259
        %278 = vmatprep.subr.bf16.mxu0 0
        %279 = vmatpush1.bf16.xpose.msra.mxu0 %v260
        %280 = vmatprep.subr.bf16.mxu0 0
        %281 = vmatpush1.bf16.xpose.msra.mxu0 %v261
        %282 = vmatprep.subr.bf16.mxu0 0
        %283 = vmatpush1.bf16.xpose.msra.mxu0 %v262
        %284 = vmatprep.subr.bf16.mxu0 0
        %285 = vmatpush1.bf16.xpose.msra.mxu0 %v263
        %286 = vmatprep.subr.bf16.mxu0 0
        %287 = vmatpush1.bf16.xpose.msra.mxu0 %v264
        %288 = vmatprep.subr.bf16.mxu0 0
        %289 = vmatpush1.bf16.xpose.msra.mxu0 %v265
        %290 = vmatprep.subr.bf16.mxu0 0
        %291 = vmatpush1.bf16.xpose.msra.mxu0 0
        %292 = vmatprep.subr.bf16.mxu0 0
        %293 = vmatpush1.bf16.xpose.msra.mxu0 0
        %294 = vmatprep.subr.bf16.mxu0 0
        %295 = vmatpush1.bf16.xpose.msra.mxu0 0
        %296 = vmatprep.subr.bf16.mxu0 0
        %297 = vmatpush1.bf16.xpose.msra.mxu0 0
        %298 = vmatprep.subr.bf16.mxu0 0
        %299 = vmatpush1.bf16.xpose.msra.mxu0 0
        %300 = vmatprep.subr.bf16.mxu0 0
        %301 = vmatpush1.bf16.xpose.msra.mxu0 0
        %302 = vmatprep.subr.bf16.mxu0 0
        %303 = vmatpush1.bf16.xpose.msra.mxu0 0
        %304 = vmatprep.subr.bf16.mxu0 0
        %305 = vmatpush1.bf16.xpose.msra.mxu0 0
        %306 = vmatprep.mubr.bf16.mxu0 0
        %307 = vmatmul.mubr.bf16.gmra.mrb[0].mxu0 %v209
        %v308 = vpop.f32.mrb[0].mxu0
        %v309 = vadd.f32 0.0, %v308
        %v310 = vpop.f32.mrb[0].mxu0
        %v311 = vpop.f32.mrb[0].mxu0
        %v312 = vadd.f32 0.0, %v311
        %v313 = vpop.f32.mrb[0].mxu0
        %314 = vdwg.mxu0
        %v315 = vadd.f32 %v207, %v309
        %v316 = vadd.f32 %v208, %v312
        %v317 = vld [vmem:[%s2] sm:$0x1]
        %v319 = vlaneseq
        %v320 = vshrl.u32 %v319, 7
        %v321 = vsub.s32 0, %v320
        %v322 = vrot.slane %v317, %v321
        %v324 = vadd.f32 %v315, %v322
        %v325 = vadd.f32 %v316, %v322
        %326 = vst [vmem:[%s203] sm:$0xff] %v324
        %327 = vst [vmem:[%s203 + $0x8] sm:$0xff] %v325
        %s328 = sand.u32 %s97, 1
        %s329 = scalar_lea.sflag [#allocation4], %s328
        %s330 = sand.u32 %s97, 1
        %s331 = smul.addr %s330, 16
        %s332 = scalar_lea.vmem [#allocation7], %s331
        // Predicated region
        $region41: #{tpu_custom_call.1} parent=31 // pred_check
          %p333 = pneg %p107
        $region42: #{tpu_custom_call.1} parent=31 // pred_check_branch
          %335 = sbr.rel (%p333) target = $region44
        $region43: #{tpu_custom_call.1} parent=31 // pred_region
          %s336 = smul.u32 2, %s21
          %s338 = ssub.s32 256, 256
          %339 = vsyncadd %s329, %s338
          %s340 = smul.addr %s336, 128
          %s341 = scalar_lea.hbm %s3, %s340
          %s342 = sshll.u32 %s332, 4
          %s343 = int_to_ptr.vmem [resolvable:$true] %s342
          %348 = dma.vmem_to_hbm [thread:$0]  %s343, 256, %s341, %s329, 128, 128, 8
        $region44: #{tpu_custom_call.1} parent=31 // pred_fallthru
          _
      $region32: #{tpu_custom_call.1} parent=5 // pred_fallthru
        _
      %p349 = scmp.le.s32.totalorder 2, %s16
      // Predicated region
      $region45: #{tpu_custom_call.1} parent=5 // pred_check
        %p350 = pneg %p349
      $region46: #{tpu_custom_call.1} parent=5 // pred_check_branch
        %352 = sbr.rel (%p350) target = $region48
      $region47: #{tpu_custom_call.1} parent=5 // pred_region
        %s353 = ssub.s32 %s16, 2
        // Predicated region
        $region49: #{tpu_custom_call.1} parent=47 // pred_check
          %p354 = pneg %p113
        $region50: #{tpu_custom_call.1} parent=47 // pred_check_branch
          %356 = sbr.rel (%p354) target = $region52
        $region51: #{tpu_custom_call.1} parent=47 // pred_region
          %s357 = sand.u32 %s98, 1
          %s358 = scalar_lea.sflag [#allocation4], %s357
          %s359 = sand.u32 %s98, 1
          %s360 = smul.addr %s359, 16
          %s361 = scalar_lea.vmem [#allocation7], %s360
          %362 = dma.done %s358, 256
        $region52: #{tpu_custom_call.1} parent=47 // pred_fallthru
          _
      $region48: #{tpu_custom_call.1} parent=5 // pred_fallthru
        _
    $region6: #{tpu_custom_call.1} parent=1 // loop_footer
      %s20 = sadd.s32 1, %s16
    $region7: #{tpu_custom_call.1} parent=1 // loop_footer_branch
      %15 = sbr.rel target = $region3
    $region8: #{tpu_custom_call.1} parent=1 // loop_exit
      _
    %363 = vsyncpa [#allocation3], 1
    %s364 = scalar_lea.sflag [#allocation3], 1
    %365 = vsyncpa %s364, 1
    %366 = vsyncpa [#allocation6], 1
    %367 = vsyncpa [#allocation4], 1
    %s368 = scalar_lea.sflag [#allocation4], 1
    %369 = vsyncpa %s368, 1

</llo_original>
